<compile_context>
chip_gen: v5e
topology: v5e:2x2
jax: 0.10.0
libtpu: 0.0.40
codegen_flags: <defaults>
</compile_context>

<pallas_src>
import functools
import math

import jax
import jax.numpy as jnp
from jax.experimental import pallas as pl
from jax.experimental.pallas import tpu as pltpu

EPS = 1e-6


# ---------------------------------------------------------------------------
# Pallas kernel: one (block_rows, D) tile of rows per grid step
# ---------------------------------------------------------------------------
def _layer_norm_kernel(x_ref, a_ref, b_ref, o_ref, *, eps):
    x = x_ref[...].astype(jnp.float32)                      # (TR, D)
    d = x.shape[-1]
    mean = jnp.mean(x, axis=-1, keepdims=True)
    diff = x - mean
    var = jnp.sum(diff * diff, axis=-1, keepdims=True) * (1.0 / (d - 1))
    denom = jnp.sqrt(var) + eps                              # torch: eps on std
    inv = pl.reciprocal(denom, approx=True)                  # EUP slot
    inv = inv * (2.0 - denom * inv)                          # Newton -> f32 exact
    y = a_ref[...] * (diff * inv) + b_ref[...]
    o_ref[...] = y.astype(o_ref.dtype)


# ---------------------------------------------------------------------------
# wrapper: flatten leading dims, tile rows, pad if needed
# ---------------------------------------------------------------------------
def layer_norm_pallas(x, a2, b2, *, eps=EPS, block_rows=256):
    orig_shape = x.shape
    D = orig_shape[-1]
    R = int(math.prod(orig_shape[:-1])) if len(orig_shape) > 1 else 1
    x2 = x.reshape(R, D)

    # row tile: multiple of 8 (sublanes) or the full extent
    tr = block_rows if R >= block_rows else R
    n_blocks = pl.cdiv(R, tr)
    r_pad = n_blocks * tr
    if r_pad != R:
        x2 = jnp.pad(x2, ((0, r_pad - R), (0, 0)))

    a2 = a2.reshape(1, D).astype(jnp.float32)
    b2 = b2.reshape(1, D).astype(jnp.float32)

    kernel = functools.partial(_layer_norm_kernel, eps=eps)
    grid_spec = pltpu.PrefetchScalarGridSpec(
        num_scalar_prefetch=0,
        grid=(n_blocks,),
        in_specs=[
            pl.BlockSpec((tr, D), lambda i: (i, 0)),   # x rows
            pl.BlockSpec((1, D), lambda i: (0, 0)),    # a_2 (constant block)
            pl.BlockSpec((1, D), lambda i: (0, 0)),    # b_2 (constant block)
        ],
        out_specs=pl.BlockSpec((tr, D), lambda i: (i, 0)),
    )
    out = pl.pallas_call(
        kernel,
        out_shape=jax.ShapeDtypeStruct((r_pad, D), x.dtype),
        grid_spec=grid_spec,
        compiler_params=pltpu.CompilerParams(
            dimension_semantics=("parallel",)),
    )(x2, a2, b2)

    if r_pad != R:
        out = out[:R]
    return out.reshape(orig_shape)


# pure-JAX reference (torch semantics) for a sanity check
def layer_norm_ref(x, a2, b2, eps=EPS):
    mean = jnp.mean(x, axis=-1, keepdims=True)
    var = jnp.sum((x - mean) ** 2, axis=-1, keepdims=True) / (x.shape[-1] - 1)
    std = jnp.sqrt(var)
    return a2 * (x - mean) / (std + eps) + b2


# ---------------------------------------------------------------------------
if __name__ == "__main__":
    B, T, D = 2, 256, 128          # rows = 512 -> two (256, 128) tiles

    key = jax.random.PRNGKey(0)
    k1, k2, k3 = jax.random.split(key, 3)
    x = jax.random.normal(k1, (B, T, D), jnp.float32)
    # module init is ones/zeros; perturb so the affine terms are exercised
    a2 = jnp.ones((D,), jnp.float32) + 0.1 * jax.random.normal(k2, (D,), jnp.float32)
    b2 = 0.1 * jax.random.normal(k3, (D,), jnp.float32)

    out = layer_norm_pallas(x, a2, b2)
    out = jax.block_until_ready(out)

    ref = layer_norm_ref(x, a2, b2)
    assert out.shape == x.shape
    assert jnp.allclose(out, ref, rtol=2e-3, atol=2e-3), "mismatch vs reference"

    print("KERNEL_OK")
</pallas_src>

<mosaic_0001>
module attributes {stable_mosaic.version = 11 : i64} {
  func.func @_layer_norm_kernel(%arg0: i32, %arg1: memref<256x128xf32, #tpu.memory_space<vmem>>, %arg2: memref<1x128xf32, #tpu.memory_space<vmem>>, %arg3: memref<1x128xf32, #tpu.memory_space<vmem>>, %arg4: memref<256x128xf32, #tpu.memory_space<vmem>>) attributes {dimension_semantics = [#tpu.dimension_semantics<parallel>], iteration_bounds = array<i64: 2>, scalar_prefetch = 0 : i64, scratch_operands = 0 : i64, tpu.core_type = #tpu.core_type<tc>, window_params = [{transform_indices = @transform_0, window_bounds = array<i64: 256, 128>}, {pipeline_mode = #tpu.pipeline_mode<synchronous>, transform_indices = @transform_1, window_bounds = array<i64: 1, 128>}, {pipeline_mode = #tpu.pipeline_mode<synchronous>, transform_indices = @transform_2, window_bounds = array<i64: 1, 128>}, {transform_indices = @transform_3, window_bounds = array<i64: 256, 128>}]} {
    %c0 = arith.constant 0 : index
    %c0_0 = arith.constant 0 : index
    %0 = vector.load %arg1[%c0, %c0_0] : memref<256x128xf32, #tpu.memory_space<vmem>>, vector<256x128xf32>
    %cst = arith.constant dense<0.000000e+00> : vector<256xf32>
    %1 = vector.multi_reduction <add>, %0, %cst [1] : vector<256x128xf32> to vector<256xf32>
    %2 = vector.shape_cast %1 : vector<256xf32> to vector<256x1xf32>
    %cst_1 = arith.constant 1.280000e+02 : f32
    %3 = vector.broadcast %cst_1 : f32 to vector<256x1xf32>
    %4 = arith.divf %2, %3 : vector<256x1xf32>
    %5 = vector.broadcast %4 : vector<256x1xf32> to vector<256x128xf32>
    %6 = arith.subf %0, %5 : vector<256x128xf32>
    %7 = arith.mulf %6, %6 : vector<256x128xf32>
    %cst_2 = arith.constant dense<0.000000e+00> : vector<256xf32>
    %8 = vector.multi_reduction <add>, %7, %cst_2 [1] : vector<256x128xf32> to vector<256xf32>
    %9 = vector.shape_cast %8 : vector<256xf32> to vector<256x1xf32>
    %cst_3 = arith.constant 0.00787401571 : f32
    %10 = vector.broadcast %cst_3 : f32 to vector<256x1xf32>
    %11 = arith.mulf %9, %10 : vector<256x1xf32>
    %12 = math.sqrt %11 : vector<256x1xf32>
    %cst_4 = arith.constant 9.99999997E-7 : f32
    %13 = vector.broadcast %cst_4 : f32 to vector<256x1xf32>
    %14 = arith.addf %12, %13 : vector<256x1xf32>
    %15 = tpu.reciprocal %14 {approx = true} : vector<256x1xf32> -> vector<256x1xf32>
    %16 = arith.mulf %14, %15 : vector<256x1xf32>
    %cst_5 = arith.constant 2.000000e+00 : f32
    %17 = vector.broadcast %cst_5 : f32 to vector<256x1xf32>
    %18 = arith.subf %17, %16 : vector<256x1xf32>
    %19 = arith.mulf %15, %18 : vector<256x1xf32>
    %c0_6 = arith.constant 0 : index
    %c0_7 = arith.constant 0 : index
    %20 = vector.load %arg2[%c0_6, %c0_7] : memref<1x128xf32, #tpu.memory_space<vmem>>, vector<1x128xf32>
    %21 = vector.broadcast %19 : vector<256x1xf32> to vector<256x128xf32>
    %22 = arith.mulf %6, %21 : vector<256x128xf32>
    %23 = vector.broadcast %20 : vector<1x128xf32> to vector<256x128xf32>
    %24 = arith.mulf %23, %22 : vector<256x128xf32>
    %c0_8 = arith.constant 0 : index
    %c0_9 = arith.constant 0 : index
    %25 = vector.load %arg3[%c0_8, %c0_9] : memref<1x128xf32, #tpu.memory_space<vmem>>, vector<1x128xf32>
    %26 = vector.broadcast %25 : vector<1x128xf32> to vector<256x128xf32>
    %27 = arith.addf %24, %26 : vector<256x128xf32>
    %c0_10 = arith.constant 0 : index
    %c0_11 = arith.constant 0 : index
    %28 = vector.load %arg4[%c0_10, %c0_11] : memref<256x128xf32, #tpu.memory_space<vmem>>, vector<256x128xf32>
    tpu.vector_store %arg4[%c0_10, %c0_11], %27 {strides = array<i32>} : memref<256x128xf32, #tpu.memory_space<vmem>>, vector<256x128xf32>,
    return
  }
  func.func @transform_0(%arg0: i32) -> (i32, i32) {
    %c0_i32 = arith.constant 0 : i32
    %c0_i32_0 = arith.constant 0 : i32
    return %arg0, %c0_i32 : i32, i32
  }
  func.func @transform_1(%arg0: i32) -> (i32, i32) {
    %c0_i32 = arith.constant 0 : i32
    %c0_i32_0 = arith.constant 0 : i32
    %c0_i32_1 = arith.constant 0 : i32
    return %c0_i32, %c0_i32_0 : i32, i32
  }
  func.func @transform_2(%arg0: i32) -> (i32, i32) {
    %c0_i32 = arith.constant 0 : i32
    %c0_i32_0 = arith.constant 0 : i32
    %c0_i32_1 = arith.constant 0 : i32
    return %c0_i32, %c0_i32_0 : i32, i32
  }
  func.func @transform_3(%arg0: i32) -> (i32, i32) {
    %c0_i32 = arith.constant 0 : i32
    %c0_i32_0 = arith.constant 0 : i32
    return %arg0, %c0_i32 : i32, i32
  }
}

</mosaic_0001>

<llo_original>
// kernel: tpu_custom_call.1
$region0: #{tpu_custom_call.1}
  #allocation0 [shape = 'u32[]', space=smem, size = 0x4, offset = 0x4, fixed_abs, tag = 'smem constant byte address 0x4 - core index']
  #allocation1 [shape = 'u32[72,128]{1,0:T(1,128)}', space=vmem, size = 0x9000, scoped, tag = 'internal scratch']
  %s0 = inlined_call_operand.hbm [shape: f32[512,128], index: 0, kind: input, shape index: {}]
  %s1 = inlined_call_operand.hbm [shape: f32[1,128], index: 1, kind: input, shape index: {}]
  %s2 = inlined_call_operand.vmem [shape: f32[1,128], index: 2, kind: input, shape index: {}]
  %s3 = inlined_call_operand.hbm [shape: f32[512,128], index: 3, kind: output, shape index: {}]
  %s4 = sld [smem:[#allocation0]]
  $region53: #{tpu_custom_call.1} parent=0
    _
  %s6 = ssub.s32 1, %s4
  %s7 = scalar_select 0, %s6, %s4
  $region1: #{tpu_custom_call.1} parent=0
    #allocation2 [shape = 'u8[262144]{0}', space=vmem, size = 0x40000, scoped, tag = 'input window, operand 0']
    #allocation3 [shape = 's32[2]{0}', space=sflag, size = 0x8, scoped, tag = 'scoped memory for tpu_custom_call.1']
    #allocation4 [shape = 's32[2]{0}', space=sflag, size = 0x8, scoped, tag = 'scoped memory for tpu_custom_call.1']
    #allocation5 [shape = 'u8[512]{0}', space=vmem, size = 0x400, scoped, tag = 'input window, operand 1, single buffered']
    #allocation6 [shape = 's32[1]{0}', space=sflag, size = 0x4, scoped, tag = 'scoped memory for tpu_custom_call.1']
    #allocation7 [shape = 'u8[262144]{0}', space=vmem, size = 0x40000, scoped, tag = 'output window, operand 0']
    %8 = vsyncpa [#allocation3], 0
    %s9 = scalar_lea.sflag [#allocation3], 1
    %10 = vsyncpa %s9, 0
    %11 = vsyncpa [#allocation6], 0
    %12 = vsyncpa [#allocation4], 0
    %s13 = scalar_lea.sflag [#allocation4], 1
    %14 = vsyncpa %s13, 0
    loop: start=0, step=1, limit=4
    $region2: #{tpu_custom_call.1} parent=1 // loop_pre_header
      _
    $region3: #{tpu_custom_call.1} parent=1 // loop_header
      %s16 = sphi 0, %s20
      %p17 = scmp.ge.s32.totalorder %s16, 4
      %s26 = sphi 0, %s28
      %s29 = sphi 0, %s26
      %s30 = sphi 0, %s29
      %s46 = sphi 0, %s30
      %s50 = sphi 0, %s50
      %s52 = sphi 0, %s50
      %s53 = sphi 0, %s52
      %s67 = sphi 0, %s53
      %s71 = sphi 0, %s71
      %s73 = sphi 0, %s71
      %s74 = sphi 0, %s73
      %s88 = sphi 0, %s74
      %s94 = sphi 0, %s96
      %s97 = sphi 0, %s94
      %s98 = sphi 0, %s97
      %s114 = sphi 0, %s98
    $region4: #{tpu_custom_call.1} parent=1 // loop_header_branch
      %19 = sbr.rel (%p17) target = $region8
    $region5: #{tpu_custom_call.1} parent=1 // loop_body
      %s21 = ssub.s32 %s16, 1
      %s22 = ssub.s32 %s16, 2
      %s23 = sadd.s32 %s16, 1
      %s24 = ssub.s32 %s16, %s23
      %p25 = scmp.eq.s32.totalorder %s24, 0
      %s27 = sadd.s32 %s26, 1
      %s28 = scalar_select %p25, %s26, %s27
      %p31 = pneg %p25
      %p32 = scmp.eq.s32.totalorder %s16, 1
      %p33 = por %p31, %p32
      %p34 = scmp.ne.s32.totalorder %s26, %s29
      %p35 = scmp.eq.s32.totalorder %s16, 0
      %p36 = por %p34, %p35
      %p37 = scmp.ne.s32.totalorder %s26, %s29
      %p38 = scmp.eq.s32.totalorder %s21, 1
      %p39 = por %p37, %p38
      %p40 = scmp.ne.s32.totalorder %s29, %s30
      %p41 = scmp.eq.s32.totalorder %s21, 0
      %p42 = por %p40, %p41
      %p43 = scmp.ne.s32.totalorder %s29, %s30
      %p44 = scmp.eq.s32.totalorder %s22, 1
      %p45 = por %p43, %p44
      %p47 = scmp.ne.s32.totalorder %s30, %s46
      %p48 = scmp.eq.s32.totalorder %s22, 0
      %p49 = por %p47, %p48
      %s51 = sadd.s32 %s50, 1
      %p54 = scmp.eq.s32.totalorder %s16, 1
      %p55 = scmp.ne.s32.totalorder %s50, %s52
      %p56 = scmp.eq.s32.totalorder %s16, 0
      %p57 = por %p55, %p56
      %p58 = scmp.ne.s32.totalorder %s50, %s52
      %p59 = scmp.eq.s32.totalorder %s21, 1
      %p60 = por %p58, %p59
      %p61 = scmp.ne.s32.totalorder %s52, %s53
      %p62 = scmp.eq.s32.totalorder %s21, 0
      %p63 = por %p61, %p62
      %p64 = scmp.ne.s32.totalorder %s52, %s53
      %p65 = scmp.eq.s32.totalorder %s22, 1
      %p66 = por %p64, %p65
      %p68 = scmp.ne.s32.totalorder %s53, %s67
      %p69 = scmp.eq.s32.totalorder %s22, 0
      %p70 = por %p68, %p69
      %s72 = sadd.s32 %s71, 1
      %p75 = scmp.eq.s32.totalorder %s16, 1
      %p76 = scmp.ne.s32.totalorder %s71, %s73
      %p77 = scmp.eq.s32.totalorder %s16, 0
      %p78 = por %p76, %p77
      %p79 = scmp.ne.s32.totalorder %s71, %s73
      %p80 = scmp.eq.s32.totalorder %s21, 1
      %p81 = por %p79, %p80
      %p82 = scmp.ne.s32.totalorder %s73, %s74
      %p83 = scmp.eq.s32.totalorder %s21, 0
      %p84 = por %p82, %p83
      %p85 = scmp.ne.s32.totalorder %s73, %s74
      %p86 = scmp.eq.s32.totalorder %s22, 1
      %p87 = por %p85, %p86
      %p89 = scmp.ne.s32.totalorder %s74, %s88
      %p90 = scmp.eq.s32.totalorder %s22, 0
      %p91 = por %p89, %p90
      %s92 = ssub.s32 %s16, %s23
      %p93 = scmp.eq.s32.totalorder %s92, 0
      %s95 = sadd.s32 %s94, 1
      %s96 = scalar_select %p93, %s94, %s95
      %p99 = pneg %p93
      %p100 = scmp.eq.s32.totalorder %s16, 1
      %p101 = por %p99, %p100
      %p102 = scmp.ne.s32.totalorder %s94, %s97
      %p103 = scmp.eq.s32.totalorder %s16, 0
      %p104 = por %p102, %p103
      %p105 = scmp.ne.s32.totalorder %s94, %s97
      %p106 = scmp.eq.s32.totalorder %s21, 1
      %p107 = por %p105, %p106
      %p108 = scmp.ne.s32.totalorder %s97, %s98
      %p109 = scmp.eq.s32.totalorder %s21, 0
      %p110 = por %p108, %p109
      %p111 = scmp.ne.s32.totalorder %s97, %s98
      %p112 = scmp.eq.s32.totalorder %s22, 1
      %p113 = por %p111, %p112
      %p115 = scmp.ne.s32.totalorder %s98, %s114
      %p116 = scmp.eq.s32.totalorder %s22, 0
      %p117 = por %p115, %p116
      %p118 = scmp.le.s32.totalorder 1, %s16
      %p119 = scmp.lt.s32.totalorder %s16, 3
      %p120 = pnand %p118, %p119
      %p121 = pneg %p120
      // Predicated region
      $region9: #{tpu_custom_call.1} parent=5 // pred_check
        _
      $region10: #{tpu_custom_call.1} parent=5 // pred_check_branch
        %123 = sbr.rel (%p120) target = $region12
      $region11: #{tpu_custom_call.1} parent=5 // pred_region
        %s124 = ssub.s32 %s16, 1
        // Predicated region
        $region13: #{tpu_custom_call.1} parent=11 // pred_check
          %p125 = pneg %p63
        $region14: #{tpu_custom_call.1} parent=11 // pred_check_branch
          %127 = sbr.rel (%p125) target = $region16
        $region15: #{tpu_custom_call.1} parent=11 // pred_region
          %129 = vsyncadd [#allocation6], 0
          %s131 = sshll.u32 %s1, 4
          %s132 = int_to_ptr.hbm [resolvable:$true] %s131
          %s133 = sshll.u32 [#allocation5], 4
          %s134 = int_to_ptr.vmem [resolvable:$true] %s133
          %136 = dma.hbm_to_vmem [thread:$0]  %s132, 16, %s134, [#allocation6]
        $region16: #{tpu_custom_call.1} parent=11 // pred_fallthru
          _
        // Predicated region
        $region17: #{tpu_custom_call.1} parent=11 // pred_check
          %p137 = pneg %p84
        $region18: #{tpu_custom_call.1} parent=11 // pred_check_branch
          %139 = sbr.rel (%p137) target = $region20
        $region19: #{tpu_custom_call.1} parent=11 // pred_region
          _
        $region20: #{tpu_custom_call.1} parent=11 // pred_fallthru
          _
      $region12: #{tpu_custom_call.1} parent=5 // pred_fallthru
        _
      %p140 = scmp.lt.s32.totalorder %s16, 2
      // Predicated region
      $region21: #{tpu_custom_call.1} parent=5 // pred_check
        %p141 = pneg %p140
      $region22: #{tpu_custom_call.1} parent=5 // pred_check_branch
        %143 = sbr.rel (%p141) target = $region24
      $region23: #{tpu_custom_call.1} parent=5 // pred_region
        // Predicated region
        $region25: #{tpu_custom_call.1} parent=23 // pred_check
          %p144 = pneg %p36
        $region26: #{tpu_custom_call.1} parent=23 // pred_check_branch
          %146 = sbr.rel (%p144) target = $region28
        $region27: #{tpu_custom_call.1} parent=23 // pred_region
          %s147 = sand.u32 %s26, 1
          %s148 = scalar_lea.sflag [#allocation3], %s147
          %s149 = sand.u32 %s26, 1
          %s150 = smul.addr %s149, 256
          %s151 = scalar_lea.vmem [#allocation2], %s150
          %s152 = smul.u32 32, %s16
          %154 = vsyncadd %s148, 0
          %s155 = smul.addr %s152, 8
          %s156 = scalar_lea.hbm %s0, %s155
          %s157 = sshll.u32 %s156, 4
          %s158 = int_to_ptr.hbm [resolvable:$true] %s157
          %s159 = sshll.u32 %s151, 4
          %s160 = int_to_ptr.vmem [resolvable:$true] %s159
          %165 = dma.hbm_to_vmem [thread:$0]  %s158, 4096, %s160, %s148, 128, 128, 8
        $region28: #{tpu_custom_call.1} parent=23 // pred_fallthru
          _
      $region24: #{tpu_custom_call.1} parent=5 // pred_fallthru
        _
      %p166 = scmp.le.s32.totalorder 1, %s16
      %p167 = scmp.lt.s32.totalorder %s16, 3
      %p168 = pnand %p166, %p167
      %p169 = pneg %p168
      // Predicated region
      $region29: #{tpu_custom_call.1} parent=5 // pred_check
        _
      $region30: #{tpu_custom_call.1} parent=5 // pred_check_branch
        %171 = sbr.rel (%p168) target = $region32
      $region31: #{tpu_custom_call.1} parent=5 // pred_region
        %s172 = ssub.s32 %s16, 1
        %s173 = sand.u32 %s29, 1
        %s174 = scalar_lea.sflag [#allocation3], %s173
        %s175 = sand.u32 %s29, 1
        %s176 = smul.addr %s175, 256
        %s177 = scalar_lea.vmem [#allocation2], %s176
        // Predicated region
        $region33: #{tpu_custom_call.1} parent=31 // pred_check
          %p178 = pneg %p42
        $region34: #{tpu_custom_call.1} parent=31 // pred_check_branch
          %180 = sbr.rel (%p178) target = $region36
        $region35: #{tpu_custom_call.1} parent=31 // pred_region
          %182 = dma.done %s174, 4096
        $region36: #{tpu_custom_call.1} parent=31 // pred_fallthru
          _
        // Predicated region
        $region37: #{tpu_custom_call.1} parent=31 // pred_check
          %p183 = pneg %p63
        $region38: #{tpu_custom_call.1} parent=31 // pred_check_branch
          %185 = sbr.rel (%p183) target = $region40
        $region39: #{tpu_custom_call.1} parent=31 // pred_region
          %187 = dma.done [#allocation6], 16
        $region40: #{tpu_custom_call.1} parent=31 // pred_fallthru
          _
        %s188 = sand.u32 %s29, 1
        %s189 = scalar_lea.sflag [#allocation3], %s188
        %s190 = sand.u32 %s29, 1
        %s191 = smul.addr %s190, 256
        %s192 = scalar_lea.vmem [#allocation2], %s191
        %p193 = pneg %p42
        %p194 = pneg %p39
        %p195 = pneg %p63
        %p196 = pneg %p60
        %p197 = pneg %p84
        %p198 = pneg %p81
        %p199 = pneg %p110
        %p200 = pneg %p107
        %s201 = sand.u32 %s97, 1
        %s202 = scalar_lea.sflag [#allocation4], %s201
        %s203 = sand.u32 %s97, 1
        %s204 = smul.addr %s203, 256
        %s205 = scalar_lea.vmem [#allocation7], %s204
        %s206 = smul.u32 32, %s21
        %s207 = smul.u32 32, %s21
        %v208 = vld [vmem:[%s177] sm:$0xff]
        %v209 = vld [vmem:[%s177 + $0x8] sm:$0xff]
        %v210 = vld [vmem:[%s177 + $0x10] sm:$0xff]
        %v211 = vld [vmem:[%s177 + $0x18] sm:$0xff]
        %v212 = vld [vmem:[%s177 + $0x20] sm:$0xff]
        %v213 = vld [vmem:[%s177 + $0x28] sm:$0xff]
        %v214 = vld [vmem:[%s177 + $0x30] sm:$0xff]
        %v215 = vld [vmem:[%s177 + $0x38] sm:$0xff]
        %v216 = vld [vmem:[%s177 + $0x40] sm:$0xff]
        %v217 = vld [vmem:[%s177 + $0x48] sm:$0xff]
        %v218 = vld [vmem:[%s177 + $0x50] sm:$0xff]
        %v219 = vld [vmem:[%s177 + $0x58] sm:$0xff]
        %v220 = vld [vmem:[%s177 + $0x60] sm:$0xff]
        %v221 = vld [vmem:[%s177 + $0x68] sm:$0xff]
        %v222 = vld [vmem:[%s177 + $0x70] sm:$0xff]
        %v223 = vld [vmem:[%s177 + $0x78] sm:$0xff]
        %v224 = vld [vmem:[%s177 + $0x80] sm:$0xff]
        %v225 = vld [vmem:[%s177 + $0x88] sm:$0xff]
        %v226 = vld [vmem:[%s177 + $0x90] sm:$0xff]
        %v227 = vld [vmem:[%s177 + $0x98] sm:$0xff]
        %v228 = vld [vmem:[%s177 + $0xa0] sm:$0xff]
        %v229 = vld [vmem:[%s177 + $0xa8] sm:$0xff]
        %v230 = vld [vmem:[%s177 + $0xb0] sm:$0xff]
        %v231 = vld [vmem:[%s177 + $0xb8] sm:$0xff]
        %v232 = vld [vmem:[%s177 + $0xc0] sm:$0xff]
        %v233 = vld [vmem:[%s177 + $0xc8] sm:$0xff]
        %v234 = vld [vmem:[%s177 + $0xd0] sm:$0xff]
        %v235 = vld [vmem:[%s177 + $0xd8] sm:$0xff]
        %v236 = vld [vmem:[%s177 + $0xe0] sm:$0xff]
        %v237 = vld [vmem:[%s177 + $0xe8] sm:$0xff]
        %v238 = vld [vmem:[%s177 + $0xf0] sm:$0xff]
        %v239 = vld [vmem:[%s177 + $0xf8] sm:$0xff]
        %240 = vadd.xlane.f32.xlu0 %v208
        %v241 = vpop.xlane.xlu0 %240
        %242 = vadd.xlane.f32.xlu0 %v209
        %v243 = vpop.xlane.xlu0 %242
        %244 = vadd.xlane.f32.xlu0 %v210
        %v245 = vpop.xlane.xlu0 %244
        %246 = vadd.xlane.f32.xlu0 %v211
        %v247 = vpop.xlane.xlu0 %246
        %248 = vadd.xlane.f32.xlu0 %v212
        %v249 = vpop.xlane.xlu0 %248
        %250 = vadd.xlane.f32.xlu0 %v213
        %v251 = vpop.xlane.xlu0 %250
        %252 = vadd.xlane.f32.xlu0 %v214
        %v253 = vpop.xlane.xlu0 %252
        %254 = vadd.xlane.f32.xlu0 %v215
        %v255 = vpop.xlane.xlu0 %254
        %256 = vadd.xlane.f32.xlu0 %v216
        %v257 = vpop.xlane.xlu0 %256
        %258 = vadd.xlane.f32.xlu0 %v217
        %v259 = vpop.xlane.xlu0 %258
        %260 = vadd.xlane.f32.xlu0 %v218
        %v261 = vpop.xlane.xlu0 %260
        %262 = vadd.xlane.f32.xlu0 %v219
        %v263 = vpop.xlane.xlu0 %262
        %264 = vadd.xlane.f32.xlu0 %v220
        %v265 = vpop.xlane.xlu0 %264
        %266 = vadd.xlane.f32.xlu0 %v221
        %v267 = vpop.xlane.xlu0 %266
        %268 = vadd.xlane.f32.xlu0 %v222
        %v269 = vpop.xlane.xlu0 %268
        %270 = vadd.xlane.f32.xlu0 %v223
        %v271 = vpop.xlane.xlu0 %270
        %272 = vadd.xlane.f32.xlu0 %v224
        %v273 = vpop.xlane.xlu0 %272
        %274 = vadd.xlane.f32.xlu0 %v225
        %v275 = vpop.xlane.xlu0 %274
        %276 = vadd.xlane.f32.xlu0 %v226
        %v277 = vpop.xlane.xlu0 %276
        %278 = vadd.xlane.f32.xlu0 %v227
        %v279 = vpop.xlane.xlu0 %278
        %280 = vadd.xlane.f32.xlu0 %v228
        %v281 = vpop.xlane.xlu0 %280
        %282 = vadd.xlane.f32.xlu0 %v229
        %v283 = vpop.xlane.xlu0 %282
        %284 = vadd.xlane.f32.xlu0 %v230
        %v285 = vpop.xlane.xlu0 %284
        %286 = vadd.xlane.f32.xlu0 %v231
        %v287 = vpop.xlane.xlu0 %286
        %288 = vadd.xlane.f32.xlu0 %v232
        %v289 = vpop.xlane.xlu0 %288
        %290 = vadd.xlane.f32.xlu0 %v233
        %v291 = vpop.xlane.xlu0 %290
        %292 = vadd.xlane.f32.xlu0 %v234
        %v293 = vpop.xlane.xlu0 %292
        %294 = vadd.xlane.f32.xlu0 %v235
        %v295 = vpop.xlane.xlu0 %294
        %296 = vadd.xlane.f32.xlu0 %v236
        %v297 = vpop.xlane.xlu0 %296
        %298 = vadd.xlane.f32.xlu0 %v237
        %v299 = vpop.xlane.xlu0 %298
        %300 = vadd.xlane.f32.xlu0 %v238
        %v301 = vpop.xlane.xlu0 %300
        %302 = vadd.xlane.f32.xlu0 %v239
        %v303 = vpop.xlane.xlu0 %302
        %v304 = vrcp.pop 128.0
        %v305 = vmul.f32 128.0, %v304
        %v306 = vsub.f32 1.0, %v305
        %v307 = vmul.f32 %v304, %v306
        %v308 = vadd.f32 %v304, %v307
        %vm309 = vweird.f32 %v304
        %v310 = vsel %vm309, %v304, %v308
        %v311 = vmul.f32 %v241, %v310
        %v312 = vmul.f32 %v243, %v310
        %v313 = vmul.f32 %v245, %v310
        %v314 = vmul.f32 %v247, %v310
        %v315 = vmul.f32 %v249, %v310
        %v316 = vmul.f32 %v251, %v310
        %v317 = vmul.f32 %v253, %v310
        %v318 = vmul.f32 %v255, %v310
        %v319 = vmul.f32 %v257, %v310
        %v320 = vmul.f32 %v259, %v310
        %v321 = vmul.f32 %v261, %v310
        %v322 = vmul.f32 %v263, %v310
        %v323 = vmul.f32 %v265, %v310
        %v324 = vmul.f32 %v267, %v310
        %v325 = vmul.f32 %v269, %v310
        %v326 = vmul.f32 %v271, %v310
        %v327 = vmul.f32 %v273, %v310
        %v328 = vmul.f32 %v275, %v310
        %v329 = vmul.f32 %v277, %v310
        %v330 = vmul.f32 %v279, %v310
        %v331 = vmul.f32 %v281, %v310
        %v332 = vmul.f32 %v283, %v310
        %v333 = vmul.f32 %v285, %v310
        %v334 = vmul.f32 %v287, %v310
        %v335 = vmul.f32 %v289, %v310
        %v336 = vmul.f32 %v291, %v310
        %v337 = vmul.f32 %v293, %v310
        %v338 = vmul.f32 %v295, %v310
        %v339 = vmul.f32 %v297, %v310
        %v340 = vmul.f32 %v299, %v310
        %v341 = vmul.f32 %v301, %v310
        %v342 = vmul.f32 %v303, %v310
        %v343 = vsub.f32 %v208, %v311
        %v344 = vsub.f32 %v209, %v312
        %v345 = vsub.f32 %v210, %v313
        %v346 = vsub.f32 %v211, %v314
        %v347 = vsub.f32 %v212, %v315
        %v348 = vsub.f32 %v213, %v316
        %v349 = vsub.f32 %v214, %v317
        %v350 = vsub.f32 %v215, %v318
        %v351 = vsub.f32 %v216, %v319
        %v352 = vsub.f32 %v217, %v320
        %v353 = vsub.f32 %v218, %v321
        %v354 = vsub.f32 %v219, %v322
        %v355 = vsub.f32 %v220, %v323
        %v356 = vsub.f32 %v221, %v324
        %v357 = vsub.f32 %v222, %v325
        %v358 = vsub.f32 %v223, %v326
        %v359 = vsub.f32 %v224, %v327
        %v360 = vsub.f32 %v225, %v328
        %v361 = vsub.f32 %v226, %v329
        %v362 = vsub.f32 %v227, %v330
        %v363 = vsub.f32 %v228, %v331
        %v364 = vsub.f32 %v229, %v332
        %v365 = vsub.f32 %v230, %v333
        %v366 = vsub.f32 %v231, %v334
        %v367 = vsub.f32 %v232, %v335
        %v368 = vsub.f32 %v233, %v336
        %v369 = vsub.f32 %v234, %v337
        %v370 = vsub.f32 %v235, %v338
        %v371 = vsub.f32 %v236, %v339
        %v372 = vsub.f32 %v237, %v340
        %v373 = vsub.f32 %v238, %v341
        %v374 = vsub.f32 %v239, %v342
        %v375 = vmul.f32 %v343, %v343
        %v376 = vmul.f32 %v344, %v344
        %v377 = vmul.f32 %v345, %v345
        %v378 = vmul.f32 %v346, %v346
        %v379 = vmul.f32 %v347, %v347
        %v380 = vmul.f32 %v348, %v348
        %v381 = vmul.f32 %v349, %v349
        %v382 = vmul.f32 %v350, %v350
        %v383 = vmul.f32 %v351, %v351
        %v384 = vmul.f32 %v352, %v352
        %v385 = vmul.f32 %v353, %v353
        %v386 = vmul.f32 %v354, %v354
        %v387 = vmul.f32 %v355, %v355
        %v388 = vmul.f32 %v356, %v356
        %v389 = vmul.f32 %v357, %v357
        %v390 = vmul.f32 %v358, %v358
        %v391 = vmul.f32 %v359, %v359
        %v392 = vmul.f32 %v360, %v360
        %v393 = vmul.f32 %v361, %v361
        %v394 = vmul.f32 %v362, %v362
        %v395 = vmul.f32 %v363, %v363
        %v396 = vmul.f32 %v364, %v364
        %v397 = vmul.f32 %v365, %v365
        %v398 = vmul.f32 %v366, %v366
        %v399 = vmul.f32 %v367, %v367
        %v400 = vmul.f32 %v368, %v368
        %v401 = vmul.f32 %v369, %v369
        %v402 = vmul.f32 %v370, %v370
        %v403 = vmul.f32 %v371, %v371
        %v404 = vmul.f32 %v372, %v372
        %v405 = vmul.f32 %v373, %v373
        %v406 = vmul.f32 %v374, %v374
        %407 = vadd.xlane.f32.xlu0 %v375
        %v408 = vpop.xlane.xlu0 %407
        %409 = vadd.xlane.f32.xlu0 %v376
        %v410 = vpop.xlane.xlu0 %409
        %411 = vadd.xlane.f32.xlu0 %v377
        %v412 = vpop.xlane.xlu0 %411
        %413 = vadd.xlane.f32.xlu0 %v378
        %v414 = vpop.xlane.xlu0 %413
        %415 = vadd.xlane.f32.xlu0 %v379
        %v416 = vpop.xlane.xlu0 %415
        %417 = vadd.xlane.f32.xlu0 %v380
        %v418 = vpop.xlane.xlu0 %417
        %419 = vadd.xlane.f32.xlu0 %v381
        %v420 = vpop.xlane.xlu0 %419
        %421 = vadd.xlane.f32.xlu0 %v382
        %v422 = vpop.xlane.xlu0 %421
        %423 = vadd.xlane.f32.xlu0 %v383
        %v424 = vpop.xlane.xlu0 %423
        %425 = vadd.xlane.f32.xlu0 %v384
        %v426 = vpop.xlane.xlu0 %425
        %427 = vadd.xlane.f32.xlu0 %v385
        %v428 = vpop.xlane.xlu0 %427
        %429 = vadd.xlane.f32.xlu0 %v386
        %v430 = vpop.xlane.xlu0 %429
        %431 = vadd.xlane.f32.xlu0 %v387
        %v432 = vpop.xlane.xlu0 %431
        %433 = vadd.xlane.f32.xlu0 %v388
        %v434 = vpop.xlane.xlu0 %433
        %435 = vadd.xlane.f32.xlu0 %v389
        %v436 = vpop.xlane.xlu0 %435
        %437 = vadd.xlane.f32.xlu0 %v390
        %v438 = vpop.xlane.xlu0 %437
        %439 = vadd.xlane.f32.xlu0 %v391
        %v440 = vpop.xlane.xlu0 %439
        %441 = vadd.xlane.f32.xlu0 %v392
        %v442 = vpop.xlane.xlu0 %441
        %443 = vadd.xlane.f32.xlu0 %v393
        %v444 = vpop.xlane.xlu0 %443
        %445 = vadd.xlane.f32.xlu0 %v394
        %v446 = vpop.xlane.xlu0 %445
        %447 = vadd.xlane.f32.xlu0 %v395
        %v448 = vpop.xlane.xlu0 %447
        %449 = vadd.xlane.f32.xlu0 %v396
        %v450 = vpop.xlane.xlu0 %449
        %451 = vadd.xlane.f32.xlu0 %v397
        %v452 = vpop.xlane.xlu0 %451
        %453 = vadd.xlane.f32.xlu0 %v398
        %v454 = vpop.xlane.xlu0 %453
        %455 = vadd.xlane.f32.xlu0 %v399
        %v456 = vpop.xlane.xlu0 %455
        %457 = vadd.xlane.f32.xlu0 %v400
        %v458 = vpop.xlane.xlu0 %457
        %459 = vadd.xlane.f32.xlu0 %v401
        %v460 = vpop.xlane.xlu0 %459
        %461 = vadd.xlane.f32.xlu0 %v402
        %v462 = vpop.xlane.xlu0 %461
        %463 = vadd.xlane.f32.xlu0 %v403
        %v464 = vpop.xlane.xlu0 %463
        %465 = vadd.xlane.f32.xlu0 %v404
        %v466 = vpop.xlane.xlu0 %465
        %467 = vadd.xlane.f32.xlu0 %v405
        %v468 = vpop.xlane.xlu0 %467
        %469 = vadd.xlane.f32.xlu0 %v406
        %v470 = vpop.xlane.xlu0 %469
        %v471 = vmul.f32 %v408, 0.007874016
        %v472 = vmul.f32 %v410, 0.007874016
        %v473 = vmul.f32 %v412, 0.007874016
        %v474 = vmul.f32 %v414, 0.007874016
        %v475 = vmul.f32 %v416, 0.007874016
        %v476 = vmul.f32 %v418, 0.007874016
        %v477 = vmul.f32 %v420, 0.007874016
        %v478 = vmul.f32 %v422, 0.007874016
        %v479 = vmul.f32 %v424, 0.007874016
        %v480 = vmul.f32 %v426, 0.007874016
        %v481 = vmul.f32 %v428, 0.007874016
        %v482 = vmul.f32 %v430, 0.007874016
        %v483 = vmul.f32 %v432, 0.007874016
        %v484 = vmul.f32 %v434, 0.007874016
        %v485 = vmul.f32 %v436, 0.007874016
        %v486 = vmul.f32 %v438, 0.007874016
        %v487 = vmul.f32 %v440, 0.007874016
        %v488 = vmul.f32 %v442, 0.007874016
        %v489 = vmul.f32 %v444, 0.007874016
        %v490 = vmul.f32 %v446, 0.007874016
        %v491 = vmul.f32 %v448, 0.007874016
        %v492 = vmul.f32 %v450, 0.007874016
        %v493 = vmul.f32 %v452, 0.007874016
        %v494 = vmul.f32 %v454, 0.007874016
        %v495 = vmul.f32 %v456, 0.007874016
        %v496 = vmul.f32 %v458, 0.007874016
        %v497 = vmul.f32 %v460, 0.007874016
        %v498 = vmul.f32 %v462, 0.007874016
        %v499 = vmul.f32 %v464, 0.007874016
        %v500 = vmul.f32 %v466, 0.007874016
        %v501 = vmul.f32 %v468, 0.007874016
        %v502 = vmul.f32 %v470, 0.007874016
        %v503 = vrsqrt.pop %v471
        %v504 = vmul.f32 %v503, %v471
        %v505 = vmul.f32 %v504, %v503
        %v506 = vmul.f32 0.5, %v505
        %v507 = vsub.f32 1.5, %v506
        %v508 = vmul.f32 %v503, %v507
        %v509 = vmul.f32 %v471, %v508
        %vm510 = vcmp.eq.f32.partialorder %v471, inf
        %v511 = vsel %vm510, %v471, %v509
        %vm512 = vcmp.eq.f32.partialorder %v471, 0.0
        %v513 = vand.u32 %v471, 2147483648
        %v514 = vsel %vm512, %v513, %v511
        %v515 = vrsqrt.pop %v472
        %v516 = vmul.f32 %v515, %v472
        %v517 = vmul.f32 %v516, %v515
        %v518 = vmul.f32 0.5, %v517
        %v519 = vsub.f32 1.5, %v518
        %v520 = vmul.f32 %v515, %v519
        %v521 = vmul.f32 %v472, %v520
        %vm522 = vcmp.eq.f32.partialorder %v472, inf
        %v523 = vsel %vm522, %v472, %v521
        %vm524 = vcmp.eq.f32.partialorder %v472, 0.0
        %v525 = vand.u32 %v472, 2147483648
        %v526 = vsel %vm524, %v525, %v523
        %v527 = vrsqrt.pop %v473
        %v528 = vmul.f32 %v527, %v473
        %v529 = vmul.f32 %v528, %v527
        %v530 = vmul.f32 0.5, %v529
        %v531 = vsub.f32 1.5, %v530
        %v532 = vmul.f32 %v527, %v531
        %v533 = vmul.f32 %v473, %v532
        %vm534 = vcmp.eq.f32.partialorder %v473, inf
        %v535 = vsel %vm534, %v473, %v533
        %vm536 = vcmp.eq.f32.partialorder %v473, 0.0
        %v537 = vand.u32 %v473, 2147483648
        %v538 = vsel %vm536, %v537, %v535
        %v539 = vrsqrt.pop %v474
        %v540 = vmul.f32 %v539, %v474
        %v541 = vmul.f32 %v540, %v539
        %v542 = vmul.f32 0.5, %v541
        %v543 = vsub.f32 1.5, %v542
        %v544 = vmul.f32 %v539, %v543
        %v545 = vmul.f32 %v474, %v544
        %vm546 = vcmp.eq.f32.partialorder %v474, inf
        %v547 = vsel %vm546, %v474, %v545
        %vm548 = vcmp.eq.f32.partialorder %v474, 0.0
        %v549 = vand.u32 %v474, 2147483648
        %v550 = vsel %vm548, %v549, %v547
        %v551 = vrsqrt.pop %v475
        %v552 = vmul.f32 %v551, %v475
        %v553 = vmul.f32 %v552, %v551
        %v554 = vmul.f32 0.5, %v553
        %v555 = vsub.f32 1.5, %v554
        %v556 = vmul.f32 %v551, %v555
        %v557 = vmul.f32 %v475, %v556
        %vm558 = vcmp.eq.f32.partialorder %v475, inf
        %v559 = vsel %vm558, %v475, %v557
        %vm560 = vcmp.eq.f32.partialorder %v475, 0.0
        %v561 = vand.u32 %v475, 2147483648
        %v562 = vsel %vm560, %v561, %v559
        %v563 = vrsqrt.pop %v476
        %v564 = vmul.f32 %v563, %v476
        %v565 = vmul.f32 %v564, %v563
        %v566 = vmul.f32 0.5, %v565
        %v567 = vsub.f32 1.5, %v566
        %v568 = vmul.f32 %v563, %v567
        %v569 = vmul.f32 %v476, %v568
        %vm570 = vcmp.eq.f32.partialorder %v476, inf
        %v571 = vsel %vm570, %v476, %v569
        %vm572 = vcmp.eq.f32.partialorder %v476, 0.0
        %v573 = vand.u32 %v476, 2147483648
        %v574 = vsel %vm572, %v573, %v571
        %v575 = vrsqrt.pop %v477
        %v576 = vmul.f32 %v575, %v477
        %v577 = vmul.f32 %v576, %v575
        %v578 = vmul.f32 0.5, %v577
        %v579 = vsub.f32 1.5, %v578
        %v580 = vmul.f32 %v575, %v579
        %v581 = vmul.f32 %v477, %v580
        %vm582 = vcmp.eq.f32.partialorder %v477, inf
        %v583 = vsel %vm582, %v477, %v581
        %vm584 = vcmp.eq.f32.partialorder %v477, 0.0
        %v585 = vand.u32 %v477, 2147483648
        %v586 = vsel %vm584, %v585, %v583
        %v587 = vrsqrt.pop %v478
        %v588 = vmul.f32 %v587, %v478
        %v589 = vmul.f32 %v588, %v587
        %v590 = vmul.f32 0.5, %v589
        %v591 = vsub.f32 1.5, %v590
        %v592 = vmul.f32 %v587, %v591
        %v593 = vmul.f32 %v478, %v592
        %vm594 = vcmp.eq.f32.partialorder %v478, inf
        %v595 = vsel %vm594, %v478, %v593
        %vm596 = vcmp.eq.f32.partialorder %v478, 0.0
        %v597 = vand.u32 %v478, 2147483648
        %v598 = vsel %vm596, %v597, %v595
        %v599 = vrsqrt.pop %v479
        %v600 = vmul.f32 %v599, %v479
        %v601 = vmul.f32 %v600, %v599
        %v602 = vmul.f32 0.5, %v601
        %v603 = vsub.f32 1.5, %v602
        %v604 = vmul.f32 %v599, %v603
        %v605 = vmul.f32 %v479, %v604
        %vm606 = vcmp.eq.f32.partialorder %v479, inf
        %v607 = vsel %vm606, %v479, %v605
        %vm608 = vcmp.eq.f32.partialorder %v479, 0.0
        %v609 = vand.u32 %v479, 2147483648
        %v610 = vsel %vm608, %v609, %v607
        %v611 = vrsqrt.pop %v480
        %v612 = vmul.f32 %v611, %v480
        %v613 = vmul.f32 %v612, %v611
        %v614 = vmul.f32 0.5, %v613
        %v615 = vsub.f32 1.5, %v614
        %v616 = vmul.f32 %v611, %v615
        %v617 = vmul.f32 %v480, %v616
        %vm618 = vcmp.eq.f32.partialorder %v480, inf
        %v619 = vsel %vm618, %v480, %v617
        %vm620 = vcmp.eq.f32.partialorder %v480, 0.0
        %v621 = vand.u32 %v480, 2147483648
        %v622 = vsel %vm620, %v621, %v619
        %v623 = vrsqrt.pop %v481
        %v624 = vmul.f32 %v623, %v481
        %v625 = vmul.f32 %v624, %v623
        %v626 = vmul.f32 0.5, %v625
        %v627 = vsub.f32 1.5, %v626
        %v628 = vmul.f32 %v623, %v627
        %v629 = vmul.f32 %v481, %v628
        %vm630 = vcmp.eq.f32.partialorder %v481, inf
        %v631 = vsel %vm630, %v481, %v629
        %vm632 = vcmp.eq.f32.partialorder %v481, 0.0
        %v633 = vand.u32 %v481, 2147483648
        %v634 = vsel %vm632, %v633, %v631
        %v635 = vrsqrt.pop %v482
        %v636 = vmul.f32 %v635, %v482
        %v637 = vmul.f32 %v636, %v635
        %v638 = vmul.f32 0.5, %v637
        %v639 = vsub.f32 1.5, %v638
        %v640 = vmul.f32 %v635, %v639
        %v641 = vmul.f32 %v482, %v640
        %vm642 = vcmp.eq.f32.partialorder %v482, inf
        %v643 = vsel %vm642, %v482, %v641
        %vm644 = vcmp.eq.f32.partialorder %v482, 0.0
        %v645 = vand.u32 %v482, 2147483648
        %v646 = vsel %vm644, %v645, %v643
        %v647 = vrsqrt.pop %v483
        %v648 = vmul.f32 %v647, %v483
        %v649 = vmul.f32 %v648, %v647
        %v650 = vmul.f32 0.5, %v649
        %v651 = vsub.f32 1.5, %v650
        %v652 = vmul.f32 %v647, %v651
        %v653 = vmul.f32 %v483, %v652
        %vm654 = vcmp.eq.f32.partialorder %v483, inf
        %v655 = vsel %vm654, %v483, %v653
        %vm656 = vcmp.eq.f32.partialorder %v483, 0.0
        %v657 = vand.u32 %v483, 2147483648
        %v658 = vsel %vm656, %v657, %v655
        %v659 = vrsqrt.pop %v484
        %v660 = vmul.f32 %v659, %v484
        %v661 = vmul.f32 %v660, %v659
        %v662 = vmul.f32 0.5, %v661
        %v663 = vsub.f32 1.5, %v662
        %v664 = vmul.f32 %v659, %v663
        %v665 = vmul.f32 %v484, %v664
        %vm666 = vcmp.eq.f32.partialorder %v484, inf
        %v667 = vsel %vm666, %v484, %v665
        %vm668 = vcmp.eq.f32.partialorder %v484, 0.0
        %v669 = vand.u32 %v484, 2147483648
        %v670 = vsel %vm668, %v669, %v667
        %v671 = vrsqrt.pop %v485
        %v672 = vmul.f32 %v671, %v485
        %v673 = vmul.f32 %v672, %v671
        %v674 = vmul.f32 0.5, %v673
        %v675 = vsub.f32 1.5, %v674
        %v676 = vmul.f32 %v671, %v675
        %v677 = vmul.f32 %v485, %v676
        %vm678 = vcmp.eq.f32.partialorder %v485, inf
        %v679 = vsel %vm678, %v485, %v677
        %vm680 = vcmp.eq.f32.partialorder %v485, 0.0
        %v681 = vand.u32 %v485, 2147483648
        %v682 = vsel %vm680, %v681, %v679
        %v683 = vrsqrt.pop %v486
        %v684 = vmul.f32 %v683, %v486
        %v685 = vmul.f32 %v684, %v683
        %v686 = vmul.f32 0.5, %v685
        %v687 = vsub.f32 1.5, %v686
        %v688 = vmul.f32 %v683, %v687
        %v689 = vmul.f32 %v486, %v688
        %vm690 = vcmp.eq.f32.partialorder %v486, inf
        %v691 = vsel %vm690, %v486, %v689
        %vm692 = vcmp.eq.f32.partialorder %v486, 0.0
        %v693 = vand.u32 %v486, 2147483648
        %v694 = vsel %vm692, %v693, %v691
        %v695 = vrsqrt.pop %v487
        %v696 = vmul.f32 %v695, %v487
        %v697 = vmul.f32 %v696, %v695
        %v698 = vmul.f32 0.5, %v697
        %v699 = vsub.f32 1.5, %v698
        %v700 = vmul.f32 %v695, %v699
        %v701 = vmul.f32 %v487, %v700
        %vm702 = vcmp.eq.f32.partialorder %v487, inf
        %v703 = vsel %vm702, %v487, %v701
        %vm704 = vcmp.eq.f32.partialorder %v487, 0.0
        %v705 = vand.u32 %v487, 2147483648
        %v706 = vsel %vm704, %v705, %v703
        %v707 = vrsqrt.pop %v488
        %v708 = vmul.f32 %v707, %v488
        %v709 = vmul.f32 %v708, %v707
        %v710 = vmul.f32 0.5, %v709
        %v711 = vsub.f32 1.5, %v710
        %v712 = vmul.f32 %v707, %v711
        %v713 = vmul.f32 %v488, %v712
        %vm714 = vcmp.eq.f32.partialorder %v488, inf
        %v715 = vsel %vm714, %v488, %v713
        %vm716 = vcmp.eq.f32.partialorder %v488, 0.0
        %v717 = vand.u32 %v488, 2147483648
        %v718 = vsel %vm716, %v717, %v715
        %v719 = vrsqrt.pop %v489
        %v720 = vmul.f32 %v719, %v489
        %v721 = vmul.f32 %v720, %v719
        %v722 = vmul.f32 0.5, %v721
        %v723 = vsub.f32 1.5, %v722
        %v724 = vmul.f32 %v719, %v723
        %v725 = vmul.f32 %v489, %v724
        %vm726 = vcmp.eq.f32.partialorder %v489, inf
        %v727 = vsel %vm726, %v489, %v725
        %vm728 = vcmp.eq.f32.partialorder %v489, 0.0
        %v729 = vand.u32 %v489, 2147483648
        %v730 = vsel %vm728, %v729, %v727
        %v731 = vrsqrt.pop %v490
        %v732 = vmul.f32 %v731, %v490
        %v733 = vmul.f32 %v732, %v731
        %v734 = vmul.f32 0.5, %v733
        %v735 = vsub.f32 1.5, %v734
        %v736 = vmul.f32 %v731, %v735
        %v737 = vmul.f32 %v490, %v736
        %vm738 = vcmp.eq.f32.partialorder %v490, inf
        %v739 = vsel %vm738, %v490, %v737
        %vm740 = vcmp.eq.f32.partialorder %v490, 0.0
        %v741 = vand.u32 %v490, 2147483648
        %v742 = vsel %vm740, %v741, %v739
        %v743 = vrsqrt.pop %v491
        %v744 = vmul.f32 %v743, %v491
        %v745 = vmul.f32 %v744, %v743
        %v746 = vmul.f32 0.5, %v745
        %v747 = vsub.f32 1.5, %v746
        %v748 = vmul.f32 %v743, %v747
        %v749 = vmul.f32 %v491, %v748
        %vm750 = vcmp.eq.f32.partialorder %v491, inf
        %v751 = vsel %vm750, %v491, %v749
        %vm752 = vcmp.eq.f32.partialorder %v491, 0.0
        %v753 = vand.u32 %v491, 2147483648
        %v754 = vsel %vm752, %v753, %v751
        %v755 = vrsqrt.pop %v492
        %v756 = vmul.f32 %v755, %v492
        %v757 = vmul.f32 %v756, %v755
        %v758 = vmul.f32 0.5, %v757
        %v759 = vsub.f32 1.5, %v758
        %v760 = vmul.f32 %v755, %v759
        %v761 = vmul.f32 %v492, %v760
        %vm762 = vcmp.eq.f32.partialorder %v492, inf
        %v763 = vsel %vm762, %v492, %v761
        %vm764 = vcmp.eq.f32.partialorder %v492, 0.0
        %v765 = vand.u32 %v492, 2147483648
        %v766 = vsel %vm764, %v765, %v763
        %v767 = vrsqrt.pop %v493
        %v768 = vmul.f32 %v767, %v493
        %v769 = vmul.f32 %v768, %v767
        %v770 = vmul.f32 0.5, %v769
        %v771 = vsub.f32 1.5, %v770
        %v772 = vmul.f32 %v767, %v771
        %v773 = vmul.f32 %v493, %v772
        %vm774 = vcmp.eq.f32.partialorder %v493, inf
        %v775 = vsel %vm774, %v493, %v773
        %vm776 = vcmp.eq.f32.partialorder %v493, 0.0
        %v777 = vand.u32 %v493, 2147483648
        %v778 = vsel %vm776, %v777, %v775
        %v779 = vrsqrt.pop %v494
        %v780 = vmul.f32 %v779, %v494
        %v781 = vmul.f32 %v780, %v779
        %v782 = vmul.f32 0.5, %v781
        %v783 = vsub.f32 1.5, %v782
        %v784 = vmul.f32 %v779, %v783
        %v785 = vmul.f32 %v494, %v784
        %vm786 = vcmp.eq.f32.partialorder %v494, inf
        %v787 = vsel %vm786, %v494, %v785
        %vm788 = vcmp.eq.f32.partialorder %v494, 0.0
        %v789 = vand.u32 %v494, 2147483648
        %v790 = vsel %vm788, %v789, %v787
        %v791 = vrsqrt.pop %v495
        %v792 = vmul.f32 %v791, %v495
        %v793 = vmul.f32 %v792, %v791
        %v794 = vmul.f32 0.5, %v793
        %v795 = vsub.f32 1.5, %v794
        %v796 = vmul.f32 %v791, %v795
        %v797 = vmul.f32 %v495, %v796
        %vm798 = vcmp.eq.f32.partialorder %v495, inf
        %v799 = vsel %vm798, %v495, %v797
        %vm800 = vcmp.eq.f32.partialorder %v495, 0.0
        %v801 = vand.u32 %v495, 2147483648
        %v802 = vsel %vm800, %v801, %v799
        %v803 = vrsqrt.pop %v496
        %v804 = vmul.f32 %v803, %v496
        %v805 = vmul.f32 %v804, %v803
        %v806 = vmul.f32 0.5, %v805
        %v807 = vsub.f32 1.5, %v806
        %v808 = vmul.f32 %v803, %v807
        %v809 = vmul.f32 %v496, %v808
        %vm810 = vcmp.eq.f32.partialorder %v496, inf
        %v811 = vsel %vm810, %v496, %v809
        %vm812 = vcmp.eq.f32.partialorder %v496, 0.0
        %v813 = vand.u32 %v496, 2147483648
        %v814 = vsel %vm812, %v813, %v811
        %v815 = vrsqrt.pop %v497
        %v816 = vmul.f32 %v815, %v497
        %v817 = vmul.f32 %v816, %v815
        %v818 = vmul.f32 0.5, %v817
        %v819 = vsub.f32 1.5, %v818
        %v820 = vmul.f32 %v815, %v819
        %v821 = vmul.f32 %v497, %v820
        %vm822 = vcmp.eq.f32.partialorder %v497, inf
        %v823 = vsel %vm822, %v497, %v821
        %vm824 = vcmp.eq.f32.partialorder %v497, 0.0
        %v825 = vand.u32 %v497, 2147483648
        %v826 = vsel %vm824, %v825, %v823
        %v827 = vrsqrt.pop %v498
        %v828 = vmul.f32 %v827, %v498
        %v829 = vmul.f32 %v828, %v827
        %v830 = vmul.f32 0.5, %v829
        %v831 = vsub.f32 1.5, %v830
        %v832 = vmul.f32 %v827, %v831
        %v833 = vmul.f32 %v498, %v832
        %vm834 = vcmp.eq.f32.partialorder %v498, inf
        %v835 = vsel %vm834, %v498, %v833
        %vm836 = vcmp.eq.f32.partialorder %v498, 0.0
        %v837 = vand.u32 %v498, 2147483648
        %v838 = vsel %vm836, %v837, %v835
        %v839 = vrsqrt.pop %v499
        %v840 = vmul.f32 %v839, %v499
        %v841 = vmul.f32 %v840, %v839
        %v842 = vmul.f32 0.5, %v841
        %v843 = vsub.f32 1.5, %v842
        %v844 = vmul.f32 %v839, %v843
        %v845 = vmul.f32 %v499, %v844
        %vm846 = vcmp.eq.f32.partialorder %v499, inf
        %v847 = vsel %vm846, %v499, %v845
        %vm848 = vcmp.eq.f32.partialorder %v499, 0.0
        %v849 = vand.u32 %v499, 2147483648
        %v850 = vsel %vm848, %v849, %v847
        %v851 = vrsqrt.pop %v500
        %v852 = vmul.f32 %v851, %v500
        %v853 = vmul.f32 %v852, %v851
        %v854 = vmul.f32 0.5, %v853
        %v855 = vsub.f32 1.5, %v854
        %v856 = vmul.f32 %v851, %v855
        %v857 = vmul.f32 %v500, %v856
        %vm858 = vcmp.eq.f32.partialorder %v500, inf
        %v859 = vsel %vm858, %v500, %v857
        %vm860 = vcmp.eq.f32.partialorder %v500, 0.0
        %v861 = vand.u32 %v500, 2147483648
        %v862 = vsel %vm860, %v861, %v859
        %v863 = vrsqrt.pop %v501
        %v864 = vmul.f32 %v863, %v501
        %v865 = vmul.f32 %v864, %v863
        %v866 = vmul.f32 0.5, %v865
        %v867 = vsub.f32 1.5, %v866
        %v868 = vmul.f32 %v863, %v867
        %v869 = vmul.f32 %v501, %v868
        %vm870 = vcmp.eq.f32.partialorder %v501, inf
        %v871 = vsel %vm870, %v501, %v869
        %vm872 = vcmp.eq.f32.partialorder %v501, 0.0
        %v873 = vand.u32 %v501, 2147483648
        %v874 = vsel %vm872, %v873, %v871
        %v875 = vrsqrt.pop %v502
        %v876 = vmul.f32 %v875, %v502
        %v877 = vmul.f32 %v876, %v875
        %v878 = vmul.f32 0.5, %v877
        %v879 = vsub.f32 1.5, %v878
        %v880 = vmul.f32 %v875, %v879
        %v881 = vmul.f32 %v502, %v880
        %vm882 = vcmp.eq.f32.partialorder %v502, inf
        %v883 = vsel %vm882, %v502, %v881
        %vm884 = vcmp.eq.f32.partialorder %v502, 0.0
        %v885 = vand.u32 %v502, 2147483648
        %v886 = vsel %vm884, %v885, %v883
        %v887 = vadd.f32 %v514, 1e-06
        %v888 = vadd.f32 %v526, 1e-06
        %v889 = vadd.f32 %v538, 1e-06
        %v890 = vadd.f32 %v550, 1e-06
        %v891 = vadd.f32 %v562, 1e-06
        %v892 = vadd.f32 %v574, 1e-06
        %v893 = vadd.f32 %v586, 1e-06
        %v894 = vadd.f32 %v598, 1e-06
        %v895 = vadd.f32 %v610, 1e-06
        %v896 = vadd.f32 %v622, 1e-06
        %v897 = vadd.f32 %v634, 1e-06
        %v898 = vadd.f32 %v646, 1e-06
        %v899 = vadd.f32 %v658, 1e-06
        %v900 = vadd.f32 %v670, 1e-06
        %v901 = vadd.f32 %v682, 1e-06
        %v902 = vadd.f32 %v694, 1e-06
        %v903 = vadd.f32 %v706, 1e-06
        %v904 = vadd.f32 %v718, 1e-06
        %v905 = vadd.f32 %v730, 1e-06
        %v906 = vadd.f32 %v742, 1e-06
        %v907 = vadd.f32 %v754, 1e-06
        %v908 = vadd.f32 %v766, 1e-06
        %v909 = vadd.f32 %v778, 1e-06
        %v910 = vadd.f32 %v790, 1e-06
        %v911 = vadd.f32 %v802, 1e-06
        %v912 = vadd.f32 %v814, 1e-06
        %v913 = vadd.f32 %v826, 1e-06
        %v914 = vadd.f32 %v838, 1e-06
        %v915 = vadd.f32 %v850, 1e-06
        %v916 = vadd.f32 %v862, 1e-06
        %v917 = vadd.f32 %v874, 1e-06
        %v918 = vadd.f32 %v886, 1e-06
        %v919 = vrcp.pop %v887
        %v920 = vrcp.pop %v888
        %v921 = vrcp.pop %v889
        %v922 = vrcp.pop %v890
        %v923 = vrcp.pop %v891
        %v924 = vrcp.pop %v892
        %v925 = vrcp.pop %v893
        %v926 = vrcp.pop %v894
        %v927 = vrcp.pop %v895
        %v928 = vrcp.pop %v896
        %v929 = vrcp.pop %v897
        %v930 = vrcp.pop %v898
        %v931 = vrcp.pop %v899
        %v932 = vrcp.pop %v900
        %v933 = vrcp.pop %v901
        %v934 = vrcp.pop %v902
        %v935 = vrcp.pop %v903
        %v936 = vrcp.pop %v904
        %v937 = vrcp.pop %v905
        %v938 = vrcp.pop %v906
        %v939 = vrcp.pop %v907
        %v940 = vrcp.pop %v908
        %v941 = vrcp.pop %v909
        %v942 = vrcp.pop %v910
        %v943 = vrcp.pop %v911
        %v944 = vrcp.pop %v912
        %v945 = vrcp.pop %v913
        %v946 = vrcp.pop %v914
        %v947 = vrcp.pop %v915
        %v948 = vrcp.pop %v916
        %v949 = vrcp.pop %v917
        %v950 = vrcp.pop %v918
        %v951 = vmul.f32 %v887, %v919
        %v952 = vmul.f32 %v888, %v920
        %v953 = vmul.f32 %v889, %v921
        %v954 = vmul.f32 %v890, %v922
        %v955 = vmul.f32 %v891, %v923
        %v956 = vmul.f32 %v892, %v924
        %v957 = vmul.f32 %v893, %v925
        %v958 = vmul.f32 %v894, %v926
        %v959 = vmul.f32 %v895, %v927
        %v960 = vmul.f32 %v896, %v928
        %v961 = vmul.f32 %v897, %v929
        %v962 = vmul.f32 %v898, %v930
        %v963 = vmul.f32 %v899, %v931
        %v964 = vmul.f32 %v900, %v932
        %v965 = vmul.f32 %v901, %v933
        %v966 = vmul.f32 %v902, %v934
        %v967 = vmul.f32 %v903, %v935
        %v968 = vmul.f32 %v904, %v936
        %v969 = vmul.f32 %v905, %v937
        %v970 = vmul.f32 %v906, %v938
        %v971 = vmul.f32 %v907, %v939
        %v972 = vmul.f32 %v908, %v940
        %v973 = vmul.f32 %v909, %v941
        %v974 = vmul.f32 %v910, %v942
        %v975 = vmul.f32 %v911, %v943
        %v976 = vmul.f32 %v912, %v944
        %v977 = vmul.f32 %v913, %v945
        %v978 = vmul.f32 %v914, %v946
        %v979 = vmul.f32 %v915, %v947
        %v980 = vmul.f32 %v916, %v948
        %v981 = vmul.f32 %v917, %v949
        %v982 = vmul.f32 %v918, %v950
        %v983 = vsub.f32 2.0, %v951
        %v984 = vsub.f32 2.0, %v952
        %v985 = vsub.f32 2.0, %v953
        %v986 = vsub.f32 2.0, %v954
        %v987 = vsub.f32 2.0, %v955
        %v988 = vsub.f32 2.0, %v956
        %v989 = vsub.f32 2.0, %v957
        %v990 = vsub.f32 2.0, %v958
        %v991 = vsub.f32 2.0, %v959
        %v992 = vsub.f32 2.0, %v960
        %v993 = vsub.f32 2.0, %v961
        %v994 = vsub.f32 2.0, %v962
        %v995 = vsub.f32 2.0, %v963
        %v996 = vsub.f32 2.0, %v964
        %v997 = vsub.f32 2.0, %v965
        %v998 = vsub.f32 2.0, %v966
        %v999 = vsub.f32 2.0, %v967
        %v1000 = vsub.f32 2.0, %v968
        %v1001 = vsub.f32 2.0, %v969
        %v1002 = vsub.f32 2.0, %v970
        %v1003 = vsub.f32 2.0, %v971
        %v1004 = vsub.f32 2.0, %v972
        %v1005 = vsub.f32 2.0, %v973
        %v1006 = vsub.f32 2.0, %v974
        %v1007 = vsub.f32 2.0, %v975
        %v1008 = vsub.f32 2.0, %v976
        %v1009 = vsub.f32 2.0, %v977
        %v1010 = vsub.f32 2.0, %v978
        %v1011 = vsub.f32 2.0, %v979
        %v1012 = vsub.f32 2.0, %v980
        %v1013 = vsub.f32 2.0, %v981
        %v1014 = vsub.f32 2.0, %v982
        %v1015 = vmul.f32 %v919, %v983
        %v1016 = vmul.f32 %v920, %v984
        %v1017 = vmul.f32 %v921, %v985
        %v1018 = vmul.f32 %v922, %v986
        %v1019 = vmul.f32 %v923, %v987
        %v1020 = vmul.f32 %v924, %v988
        %v1021 = vmul.f32 %v925, %v989
        %v1022 = vmul.f32 %v926, %v990
        %v1023 = vmul.f32 %v927, %v991
        %v1024 = vmul.f32 %v928, %v992
        %v1025 = vmul.f32 %v929, %v993
        %v1026 = vmul.f32 %v930, %v994
        %v1027 = vmul.f32 %v931, %v995
        %v1028 = vmul.f32 %v932, %v996
        %v1029 = vmul.f32 %v933, %v997
        %v1030 = vmul.f32 %v934, %v998
        %v1031 = vmul.f32 %v935, %v999
        %v1032 = vmul.f32 %v936, %v1000
        %v1033 = vmul.f32 %v937, %v1001
        %v1034 = vmul.f32 %v938, %v1002
        %v1035 = vmul.f32 %v939, %v1003
        %v1036 = vmul.f32 %v940, %v1004
        %v1037 = vmul.f32 %v941, %v1005
        %v1038 = vmul.f32 %v942, %v1006
        %v1039 = vmul.f32 %v943, %v1007
        %v1040 = vmul.f32 %v944, %v1008
        %v1041 = vmul.f32 %v945, %v1009
        %v1042 = vmul.f32 %v946, %v1010
        %v1043 = vmul.f32 %v947, %v1011
        %v1044 = vmul.f32 %v948, %v1012
        %v1045 = vmul.f32 %v949, %v1013
        %v1046 = vmul.f32 %v950, %v1014
        %v1047 = vld [vmem:[#allocation5] sm:$0x1]
        %v1048 = vmul.f32 %v343, %v1015
        %v1049 = vmul.f32 %v344, %v1016
        %v1050 = vmul.f32 %v345, %v1017
        %v1051 = vmul.f32 %v346, %v1018
        %v1052 = vmul.f32 %v347, %v1019
        %v1053 = vmul.f32 %v348, %v1020
        %v1054 = vmul.f32 %v349, %v1021
        %v1055 = vmul.f32 %v350, %v1022
        %v1056 = vmul.f32 %v351, %v1023
        %v1057 = vmul.f32 %v352, %v1024
        %v1058 = vmul.f32 %v353, %v1025
        %v1059 = vmul.f32 %v354, %v1026
        %v1060 = vmul.f32 %v355, %v1027
        %v1061 = vmul.f32 %v356, %v1028
        %v1062 = vmul.f32 %v357, %v1029
        %v1063 = vmul.f32 %v358, %v1030
        %v1064 = vmul.f32 %v359, %v1031
        %v1065 = vmul.f32 %v360, %v1032
        %v1066 = vmul.f32 %v361, %v1033
        %v1067 = vmul.f32 %v362, %v1034
        %v1068 = vmul.f32 %v363, %v1035
        %v1069 = vmul.f32 %v364, %v1036
        %v1070 = vmul.f32 %v365, %v1037
        %v1071 = vmul.f32 %v366, %v1038
        %v1072 = vmul.f32 %v367, %v1039
        %v1073 = vmul.f32 %v368, %v1040
        %v1074 = vmul.f32 %v369, %v1041
        %v1075 = vmul.f32 %v370, %v1042
        %v1076 = vmul.f32 %v371, %v1043
        %v1077 = vmul.f32 %v372, %v1044
        %v1078 = vmul.f32 %v373, %v1045
        %v1079 = vmul.f32 %v374, %v1046
        %v1081 = vperm.slane %v1047, 0
        %v1083 = vmul.f32 %v1081, %v1048
        %v1084 = vmul.f32 %v1081, %v1049
        %v1085 = vmul.f32 %v1081, %v1050
        %v1086 = vmul.f32 %v1081, %v1051
        %v1087 = vmul.f32 %v1081, %v1052
        %v1088 = vmul.f32 %v1081, %v1053
        %v1089 = vmul.f32 %v1081, %v1054
        %v1090 = vmul.f32 %v1081, %v1055
        %v1091 = vmul.f32 %v1081, %v1056
        %v1092 = vmul.f32 %v1081, %v1057
        %v1093 = vmul.f32 %v1081, %v1058
        %v1094 = vmul.f32 %v1081, %v1059
        %v1095 = vmul.f32 %v1081, %v1060
        %v1096 = vmul.f32 %v1081, %v1061
        %v1097 = vmul.f32 %v1081, %v1062
        %v1098 = vmul.f32 %v1081, %v1063
        %v1099 = vmul.f32 %v1081, %v1064
        %v1100 = vmul.f32 %v1081, %v1065
        %v1101 = vmul.f32 %v1081, %v1066
        %v1102 = vmul.f32 %v1081, %v1067
        %v1103 = vmul.f32 %v1081, %v1068
        %v1104 = vmul.f32 %v1081, %v1069
        %v1105 = vmul.f32 %v1081, %v1070
        %v1106 = vmul.f32 %v1081, %v1071
        %v1107 = vmul.f32 %v1081, %v1072
        %v1108 = vmul.f32 %v1081, %v1073
        %v1109 = vmul.f32 %v1081, %v1074
        %v1110 = vmul.f32 %v1081, %v1075
        %v1111 = vmul.f32 %v1081, %v1076
        %v1112 = vmul.f32 %v1081, %v1077
        %v1113 = vmul.f32 %v1081, %v1078
        %v1114 = vmul.f32 %v1081, %v1079
        %v1115 = vld [vmem:[%s2] sm:$0x1]
        %v1117 = vperm.slane %v1115, 0
        %v1119 = vadd.f32 %v1083, %v1117
        %v1120 = vadd.f32 %v1084, %v1117
        %v1121 = vadd.f32 %v1085, %v1117
        %v1122 = vadd.f32 %v1086, %v1117
        %v1123 = vadd.f32 %v1087, %v1117
        %v1124 = vadd.f32 %v1088, %v1117
        %v1125 = vadd.f32 %v1089, %v1117
        %v1126 = vadd.f32 %v1090, %v1117
        %v1127 = vadd.f32 %v1091, %v1117
        %v1128 = vadd.f32 %v1092, %v1117
        %v1129 = vadd.f32 %v1093, %v1117
        %v1130 = vadd.f32 %v1094, %v1117
        %v1131 = vadd.f32 %v1095, %v1117
        %v1132 = vadd.f32 %v1096, %v1117
        %v1133 = vadd.f32 %v1097, %v1117
        %v1134 = vadd.f32 %v1098, %v1117
        %v1135 = vadd.f32 %v1099, %v1117
        %v1136 = vadd.f32 %v1100, %v1117
        %v1137 = vadd.f32 %v1101, %v1117
        %v1138 = vadd.f32 %v1102, %v1117
        %v1139 = vadd.f32 %v1103, %v1117
        %v1140 = vadd.f32 %v1104, %v1117
        %v1141 = vadd.f32 %v1105, %v1117
        %v1142 = vadd.f32 %v1106, %v1117
        %v1143 = vadd.f32 %v1107, %v1117
        %v1144 = vadd.f32 %v1108, %v1117
        %v1145 = vadd.f32 %v1109, %v1117
        %v1146 = vadd.f32 %v1110, %v1117
        %v1147 = vadd.f32 %v1111, %v1117
        %v1148 = vadd.f32 %v1112, %v1117
        %v1149 = vadd.f32 %v1113, %v1117
        %v1150 = vadd.f32 %v1114, %v1117
        %1151 = vst [vmem:[%s205] sm:$0xff] %v1119
        %1152 = vst [vmem:[%s205 + $0x8] sm:$0xff] %v1120
        %1153 = vst [vmem:[%s205 + $0x10] sm:$0xff] %v1121
        %1154 = vst [vmem:[%s205 + $0x18] sm:$0xff] %v1122
        %1155 = vst [vmem:[%s205 + $0x20] sm:$0xff] %v1123
        %1156 = vst [vmem:[%s205 + $0x28] sm:$0xff] %v1124
        %1157 = vst [vmem:[%s205 + $0x30] sm:$0xff] %v1125
        %1158 = vst [vmem:[%s205 + $0x38] sm:$0xff] %v1126
        %1159 = vst [vmem:[%s205 + $0x40] sm:$0xff] %v1127
        %1160 = vst [vmem:[%s205 + $0x48] sm:$0xff] %v1128
        %1161 = vst [vmem:[%s205 + $0x50] sm:$0xff] %v1129
        %1162 = vst [vmem:[%s205 + $0x58] sm:$0xff] %v1130
        %1163 = vst [vmem:[%s205 + $0x60] sm:$0xff] %v1131
        %1164 = vst [vmem:[%s205 + $0x68] sm:$0xff] %v1132
        %1165 = vst [vmem:[%s205 + $0x70] sm:$0xff] %v1133
        %1166 = vst [vmem:[%s205 + $0x78] sm:$0xff] %v1134
        %1167 = vst [vmem:[%s205 + $0x80] sm:$0xff] %v1135
        %1168 = vst [vmem:[%s205 + $0x88] sm:$0xff] %v1136
        %1169 = vst [vmem:[%s205 + $0x90] sm:$0xff] %v1137
        %1170 = vst [vmem:[%s205 + $0x98] sm:$0xff] %v1138
        %1171 = vst [vmem:[%s205 + $0xa0] sm:$0xff] %v1139
        %1172 = vst [vmem:[%s205 + $0xa8] sm:$0xff] %v1140
        %1173 = vst [vmem:[%s205 + $0xb0] sm:$0xff] %v1141
        %1174 = vst [vmem:[%s205 + $0xb8] sm:$0xff] %v1142
        %1175 = vst [vmem:[%s205 + $0xc0] sm:$0xff] %v1143
        %1176 = vst [vmem:[%s205 + $0xc8] sm:$0xff] %v1144
        %1177 = vst [vmem:[%s205 + $0xd0] sm:$0xff] %v1145
        %1178 = vst [vmem:[%s205 + $0xd8] sm:$0xff] %v1146
        %1179 = vst [vmem:[%s205 + $0xe0] sm:$0xff] %v1147
        %1180 = vst [vmem:[%s205 + $0xe8] sm:$0xff] %v1148
        %1181 = vst [vmem:[%s205 + $0xf0] sm:$0xff] %v1149
        %1182 = vst [vmem:[%s205 + $0xf8] sm:$0xff] %v1150
        %s1183 = sand.u32 %s97, 1
        %s1184 = scalar_lea.sflag [#allocation4], %s1183
        %s1185 = sand.u32 %s97, 1
        %s1186 = smul.addr %s1185, 256
        %s1187 = scalar_lea.vmem [#allocation7], %s1186
        // Predicated region
        $region41: #{tpu_custom_call.1} parent=31 // pred_check
          %p1188 = pneg %p107
        $region42: #{tpu_custom_call.1} parent=31 // pred_check_branch
          %1190 = sbr.rel (%p1188) target = $region44
        $region43: #{tpu_custom_call.1} parent=31 // pred_region
          %s1191 = smul.u32 32, %s21
          %1193 = vsyncadd %s1184, 0
          %s1194 = smul.addr %s1191, 8
          %s1195 = scalar_lea.hbm %s3, %s1194
          %s1196 = sshll.u32 %s1187, 4
          %s1197 = int_to_ptr.vmem [resolvable:$true] %s1196
          %s1198 = sshll.u32 %s1195, 4
          %s1199 = int_to_ptr.hbm [resolvable:$true] %s1198
          %1204 = dma.vmem_to_hbm [thread:$0]  %s1197, 4096, %s1199, %s1184, 128, 128, 8
        $region44: #{tpu_custom_call.1} parent=31 // pred_fallthru
          _
      $region32: #{tpu_custom_call.1} parent=5 // pred_fallthru
        _
      %p1205 = scmp.le.s32.totalorder 2, %s16
      // Predicated region
      $region45: #{tpu_custom_call.1} parent=5 // pred_check
        %p1206 = pneg %p1205
      $region46: #{tpu_custom_call.1} parent=5 // pred_check_branch
        %1208 = sbr.rel (%p1206) target = $region48
      $region47: #{tpu_custom_call.1} parent=5 // pred_region
        %s1209 = ssub.s32 %s16, 2
        // Predicated region
        $region49: #{tpu_custom_call.1} parent=47 // pred_check
          %p1210 = pneg %p113
        $region50: #{tpu_custom_call.1} parent=47 // pred_check_branch
          %1212 = sbr.rel (%p1210) target = $region52
        $region51: #{tpu_custom_call.1} parent=47 // pred_region
          %s1213 = sand.u32 %s98, 1
          %s1214 = scalar_lea.sflag [#allocation4], %s1213
          %s1215 = sand.u32 %s98, 1
          %s1216 = smul.addr %s1215, 256
          %s1217 = scalar_lea.vmem [#allocation7], %s1216
          %1219 = dma.done %s1214, 4096
        $region52: #{tpu_custom_call.1} parent=47 // pred_fallthru
          _
      $region48: #{tpu_custom_call.1} parent=5 // pred_fallthru
        _
    $region6: #{tpu_custom_call.1} parent=1 // loop_footer
      %s20 = sadd.s32 1, %s16
    $region7: #{tpu_custom_call.1} parent=1 // loop_footer_branch
      %15 = sbr.rel target = $region3
    $region8: #{tpu_custom_call.1} parent=1 // loop_exit
      _
    %1220 = vsyncpa [#allocation3], 1
    %s1221 = scalar_lea.sflag [#allocation3], 1
    %1222 = vsyncpa %s1221, 1
    %1223 = vsyncpa [#allocation6], 1
    %1224 = vsyncpa [#allocation4], 1
    %s1225 = scalar_lea.sflag [#allocation4], 1
    %1226 = vsyncpa %s1225, 1

</llo_original>
